<compile_context>
chip_gen: v7x
topology: tpu7x:2x2x1
jax: 0.10.0
libtpu: 0.0.40
codegen_flags: <defaults>
</compile_context>

<pallas_src>
import math

import jax
import jax.numpy as jnp
from jax import lax
from jax.experimental import pallas as pl
from jax.experimental.pallas import tpu as pltpu


def _round_up(x, m):
    return ((x + m - 1) // m) * m


def _make_kernel(Nb, Cin, K, SPAN, SPAN_P, tap_offsets):
    """Build the conv kernel body.

    x_ref   : (Nb, Cin, L)         padded input, spatial lane-flattened
    w_ref   : (Cout_p, K + 1)      [tap-major/cin-minor weights | bias column]
    o_ref   : (Nb, Cout_p, SPAN)   stride-1 conv output at padded row pitch
    slab_ref: (K + 1, Nb*SPAN_P)   im2col slab (+ ones row for the bias), VMEM
    """

    def kernel(x_ref, w_ref, o_ref, slab_ref):
        # Bias ("ones") row: a single-row store, rewritten every grid step so it
        # is valid on every core regardless of how the grid is partitioned.
        slab_ref[K:K + 1, :] = jnp.ones((1, Nb * SPAN_P), dtype=slab_ref.dtype)

        for nb in range(Nb):
            col = nb * SPAN_P  # 128-lane aligned per-image column base (static)
            if SPAN_P > SPAN:
                # Zero the tiny lane-alignment strip so the matmul never reads
                # uninitialized VMEM (<=127 lanes, negligible).
                slab_ref[0:K, col + SPAN:col + SPAN_P] = jnp.zeros(
                    (K, SPAN_P - SPAN), dtype=slab_ref.dtype)
            # im2col: ONE bulk contiguous lane-slice copy per conv tap (KH*KW
            # copies per batch element).  All offsets are Python constants.
            for t, off in enumerate(tap_offsets):
                slab_ref[t * Cin:(t + 1) * Cin, col:col + SPAN] = (
                    x_ref[nb, :, off:off + SPAN])

        # Single fused MXU matmul over K = KH*KW*Cin (+1 bias row); the spatial
        # extent rides the lane axis.  Operands stay in the activation dtype
        # (bf16 models get the bf16 MXU path automatically).
        acc = jnp.dot(w_ref[...], slab_ref[...],
                      preferred_element_type=jnp.float32)  # (Cout_p, Nb*SPAN_P)

        for nb in range(Nb):
            col = nb * SPAN_P  # 128-aligned value slice -> dense store
            o_ref[nb, :, :] = acc[:, col:col + SPAN].astype(o_ref.dtype)

    return kernel


def conv2d_static_same_padding(x_nchw, w_oihw, bias, stride=(1, 1), dilation=(1, 1)):
    """Forward pass of Conv2dStaticSamePadding (groups=1). Input/output are NCHW."""
    N, Cin, H, W = x_nchw.shape
    Cout, Cin_w, KH, KW = w_oihw.shape
    assert Cin_w == Cin, "groups != 1 is not supported"
    sh, sw = stride
    dh, dw = dilation

    # Static "same" padding, faithful to the PyTorch module.  NOTE: the module
    # mixes axes (pad_h uses stride[1]/dilation[0], pad_w uses stride[0]/
    # dilation[1]); kept verbatim — only matters for non-square stride/dilation.
    pad_h = max((math.ceil(H / sw) - 1) * sw + (KH - 1) * dh + 1 - H, 0)
    pad_w = max((math.ceil(W / sh) - 1) * sh + (KW - 1) * dw + 1 - W, 0)
    pad_top, pad_left = pad_h // 2, pad_w // 2

    Hp, Wp = H + pad_h, W + pad_w
    assert Hp >= (KH - 1) * dh + 1 and Wp >= (KW - 1) * dw + 1, "empty output"
    H_out = (Hp - dh * (KH - 1) - 1) // sh + 1
    W_out = (Wp - dw * (KW - 1) - 1) // sw + 1

    # Stride-1 "shift" im2col geometry (stride>1 is a wrapper-side subsample).
    H_full = Hp - (KH - 1) * dh           # number of stride-1 output rows computed
    SPAN = H_full * Wp                    # per-image output/slab width (lanes)
    SPAN_P = _round_up(SPAN, 128)         # 128-lane aligned per-image slab pitch
    tail = (KW - 1) * dw                  # lanes the last tap reads past Hp*Wp
    extra_rows = -(-tail // Wp) if tail else 0
    L = (Hp + extra_rows) * Wp            # flattened (padded) input length

    # Padding is one fused XLA pad here; the kernel then needs no pad scratch,
    # no zero fill and no misaligned interior stores, and every HBM->VMEM DMA
    # row is dense.  Spatial dims are then lane-flattened (free reshape).
    if pad_h or pad_w or extra_rows:
        xp = jnp.pad(x_nchw, ((0, 0), (0, 0),
                              (pad_top, pad_h - pad_top + extra_rows),
                              (pad_left, pad_w - pad_left)))
    else:
        xp = x_nchw
    x_flat = xp.reshape(N, Cin, L)

    # Weights: OIHW -> (Cout, KH*KW*Cin) tap-major / cin-minor, bias fused as an
    # extra column, Cout padded to a multiple of 8 sublanes.  Tiny one-off op.
    K = KH * KW * Cin
    Cout_p = _round_up(Cout, 8)
    w_mat = jnp.transpose(w_oihw, (0, 2, 3, 1)).reshape(Cout, K)
    w_aug = jnp.concatenate(
        [w_mat, bias.reshape(Cout, 1)], axis=1).astype(x_nchw.dtype)
    if Cout_p > Cout:
        w_aug = jnp.pad(w_aug, ((0, Cout_p - Cout), (0, 0)))

    tap_offsets = [kh * dh * Wp + kw * dw for kh in range(KH) for kw in range(KW)]

    # ---- choose batch elements per grid step (Nb) and the VMEM limit --------
    isz = jnp.dtype(x_nchw.dtype).itemsize

    def vmem_bytes(nb):
        x_blk = 2 * nb * _round_up(Cin, 8) * _round_up(L, 128) * isz      # dbl-buffered
        o_blk = 2 * nb * Cout_p * _round_up(SPAN, 128) * isz              # dbl-buffered
        w_blk = 2 * Cout_p * _round_up(K + 1, 128) * isz
        slab = _round_up(K + 1, 8) * nb * SPAN_P * isz
        acc = Cout_p * nb * SPAN_P * 4                                    # f32 matmul result
        return x_blk + o_blk + w_blk + slab + acc

    budget = 24 << 20
    Nb = 1
    for cand in range(1, N + 1):
        if N % cand == 0 and cand <= 8 and vmem_bytes(cand) <= budget:
            Nb = cand
    needed = vmem_bytes(Nb)
    assert needed <= (44 << 20), (
        f"feature map too large for whole-image blocks ({needed >> 20} MiB); "
        "TODO(synk): add H_out tiling with a (KH-1)*dh row halo")
    vmem_limit = int(min(max(2 * needed, 16 << 20), 48 << 20))

    kernel = _make_kernel(Nb, Cin, K, SPAN, SPAN_P, tap_offsets)

    cost = pl.CostEstimate(
        flops=2 * N * Cout_p * (K + 1) * SPAN_P,
        transcendentals=0,
        bytes_accessed=(x_flat.size + w_aug.size + N * Cout_p * SPAN) * isz,
    )

    out_pp = pl.pallas_call(
        kernel,
        out_shape=jax.ShapeDtypeStruct((N, Cout_p, SPAN), x_nchw.dtype),
        grid_spec=pltpu.PrefetchScalarGridSpec(
            num_scalar_prefetch=0,
            grid=(N // Nb,),
            in_specs=[
                pl.BlockSpec((Nb, Cin, L), lambda g: (g, 0, 0)),
                pl.BlockSpec((Cout_p, K + 1), lambda g: (0, 0)),
            ],
            out_specs=pl.BlockSpec((Nb, Cout_p, SPAN), lambda g: (g, 0, 0)),
            scratch_shapes=[pltpu.VMEM((K + 1, Nb * SPAN_P), x_nchw.dtype)],
        ),
        compiler_params=pltpu.CompilerParams(
            dimension_semantics=("parallel",),
            vmem_limit_bytes=vmem_limit,
        ),
        cost_estimate=cost,
    )(x_flat, w_aug)

    # Free reshape to (N, Cout_p, H_full, Wp); one cheap output-sized slice drops
    # the pad columns / Cout padding and subsamples rows/cols for stride > 1.
    out = out_pp.reshape(N, Cout_p, H_full, Wp)
    out = out[:, :Cout, 0:(H_out - 1) * sh + 1:sh, 0:(W_out - 1) * sw + 1:sw]
    return out


if __name__ == "__main__":
    # Module config (Conv2dStaticSamePadding defaults except out_channels/kernel):
    # in_channels=4, out_channels=8, kernel_size=3, stride=1, bias=True, groups=1
    in_channels, out_channels, kernel_size = 4, 8, 3
    stride, dilation = (1, 1), (1, 1)

    key = jax.random.PRNGKey(0)
    kx, kw_, kb = jax.random.split(key, 3)

    x = jax.random.normal(kx, (2, in_channels, 16, 16), dtype=jnp.float32)
    w = 0.1 * jax.random.normal(
        kw_, (out_channels, in_channels, kernel_size, kernel_size), dtype=jnp.float32
    )
    b = 0.1 * jax.random.normal(kb, (out_channels,), dtype=jnp.float32)

    out = conv2d_static_same_padding(x, w, b, stride=stride, dilation=dilation)
    out = jax.block_until_ready(out)

    # Pure-JAX reference (same static padding + conv).
    pad_h = max((math.ceil(16 / stride[1]) - 1) * stride[1]
                + (kernel_size - 1) * dilation[0] + 1 - 16, 0)
    pad_w = max((math.ceil(16 / stride[0]) - 1) * stride[0]
                + (kernel_size - 1) * dilation[1] + 1 - 16, 0)
    xp = jnp.pad(
        x, ((0, 0), (0, 0),
            (pad_h // 2, pad_h - pad_h // 2), (pad_w // 2, pad_w - pad_w // 2))
    )
    ref = lax.conv_general_dilated(
        xp, w, window_strides=stride, padding="VALID", rhs_dilation=dilation,
        dimension_numbers=("NCHW", "OIHW", "NCHW"),
    ) + b[None, :, None, None]

    assert out.shape == ref.shape, (out.shape, ref.shape)
    assert jnp.allclose(out, ref, rtol=1e-4, atol=1e-4), float(jnp.max(jnp.abs(out - ref)))
    print("KERNEL_OK")
</pallas_src>

<mosaic_0001>
module attributes {stable_mosaic.version = 11 : i64} {
  func.func @kernel(%arg0: i32, %arg1: memref<2x4x342xf32, #tpu.memory_space<vmem>>, %arg2: memref<8x37xf32, #tpu.memory_space<vmem>>, %arg3: memref<2x8x288xf32, #tpu.memory_space<vmem>>, %arg4: memref<37x768xf32, #tpu.memory_space<vmem>>) attributes {dimension_semantics = [#tpu.dimension_semantics<parallel>], iteration_bounds = array<i64: 1>, scalar_prefetch = 0 : i64, scratch_operands = 1 : i64, tpu.core_type = #tpu.core_type<tc>, window_params = [{transform_indices = @transform_0, window_bounds = array<i64: 2, 4, 342>}, {pipeline_mode = #tpu.pipeline_mode<synchronous>, transform_indices = @transform_1, window_bounds = array<i64: 8, 37>}, {transform_indices = @transform_2, window_bounds = array<i64: 2, 8, 288>}]} {
    %cst = arith.constant 1.000000e+00 : f32
    %0 = vector.broadcast %cst : f32 to vector<1x768xf32>
    %c36 = arith.constant 36 : index
    %c0 = arith.constant 0 : index
    %1 = vector.load %arg4[%c36, %c0] : memref<37x768xf32, #tpu.memory_space<vmem>>, vector<1x768xf32>
    tpu.vector_store %arg4[%c36, %c0], %0 {strides = array<i32>} : memref<37x768xf32, #tpu.memory_space<vmem>>, vector<1x768xf32>,
    %cst_0 = arith.constant 0.000000e+00 : f32
    %2 = vector.broadcast %cst_0 : f32 to vector<36x96xf32>
    %c0_1 = arith.constant 0 : index
    %c288 = arith.constant 288 : index
    %3 = vector.load %arg4[%c0_1, %c288] : memref<37x768xf32, #tpu.memory_space<vmem>>, vector<36x96xf32>
    tpu.vector_store %arg4[%c0_1, %c288], %2 {strides = array<i32>} : memref<37x768xf32, #tpu.memory_space<vmem>>, vector<36x96xf32>,
    %c0_2 = arith.constant 0 : index
    %c0_3 = arith.constant 0 : index
    %c0_4 = arith.constant 0 : index
    %4 = vector.load %arg1[%c0_2, %c0_3, %c0_4] : memref<2x4x342xf32, #tpu.memory_space<vmem>>, vector<1x4x288xf32>
    %5 = vector.shape_cast %4 : vector<1x4x288xf32> to vector<4x288xf32>
    %c0_5 = arith.constant 0 : index
    %c0_6 = arith.constant 0 : index
    %6 = vector.load %arg4[%c0_5, %c0_6] : memref<37x768xf32, #tpu.memory_space<vmem>>, vector<4x288xf32>
    tpu.vector_store %arg4[%c0_5, %c0_6], %5 {strides = array<i32>} : memref<37x768xf32, #tpu.memory_space<vmem>>, vector<4x288xf32>,
    %c0_7 = arith.constant 0 : index
    %c0_8 = arith.constant 0 : index
    %c1 = arith.constant 1 : index
    %7 = vector.load %arg1[%c0_7, %c0_8, %c1] : memref<2x4x342xf32, #tpu.memory_space<vmem>>, vector<1x4x288xf32>
    %8 = vector.shape_cast %7 : vector<1x4x288xf32> to vector<4x288xf32>
    %c4 = arith.constant 4 : index
    %c0_9 = arith.constant 0 : index
    %9 = vector.load %arg4[%c4, %c0_9] : memref<37x768xf32, #tpu.memory_space<vmem>>, vector<4x288xf32>
    tpu.vector_store %arg4[%c4, %c0_9], %8 {strides = array<i32>} : memref<37x768xf32, #tpu.memory_space<vmem>>, vector<4x288xf32>,
    %c0_10 = arith.constant 0 : index
    %c0_11 = arith.constant 0 : index
    %c2 = arith.constant 2 : index
    %10 = vector.load %arg1[%c0_10, %c0_11, %c2] : memref<2x4x342xf32, #tpu.memory_space<vmem>>, vector<1x4x288xf32>
    %11 = vector.shape_cast %10 : vector<1x4x288xf32> to vector<4x288xf32>
    %c8 = arith.constant 8 : index
    %c0_12 = arith.constant 0 : index
    %12 = vector.load %arg4[%c8, %c0_12] : memref<37x768xf32, #tpu.memory_space<vmem>>, vector<4x288xf32>
    tpu.vector_store %arg4[%c8, %c0_12], %11 {strides = array<i32>} : memref<37x768xf32, #tpu.memory_space<vmem>>, vector<4x288xf32>,
    %c0_13 = arith.constant 0 : index
    %c0_14 = arith.constant 0 : index
    %c18 = arith.constant 18 : index
    %13 = vector.load %arg1[%c0_13, %c0_14, %c18] : memref<2x4x342xf32, #tpu.memory_space<vmem>>, vector<1x4x288xf32>
    %14 = vector.shape_cast %13 : vector<1x4x288xf32> to vector<4x288xf32>
    %c12 = arith.constant 12 : index
    %c0_15 = arith.constant 0 : index
    %15 = vector.load %arg4[%c12, %c0_15] : memref<37x768xf32, #tpu.memory_space<vmem>>, vector<4x288xf32>
    tpu.vector_store %arg4[%c12, %c0_15], %14 {strides = array<i32>} : memref<37x768xf32, #tpu.memory_space<vmem>>, vector<4x288xf32>,
    %c0_16 = arith.constant 0 : index
    %c0_17 = arith.constant 0 : index
    %c19 = arith.constant 19 : index
    %16 = vector.load %arg1[%c0_16, %c0_17, %c19] : memref<2x4x342xf32, #tpu.memory_space<vmem>>, vector<1x4x288xf32>
    %17 = vector.shape_cast %16 : vector<1x4x288xf32> to vector<4x288xf32>
    %c16 = arith.constant 16 : index
    %c0_18 = arith.constant 0 : index
    %18 = vector.load %arg4[%c16, %c0_18] : memref<37x768xf32, #tpu.memory_space<vmem>>, vector<4x288xf32>
    tpu.vector_store %arg4[%c16, %c0_18], %17 {strides = array<i32>} : memref<37x768xf32, #tpu.memory_space<vmem>>, vector<4x288xf32>,
    %c0_19 = arith.constant 0 : index
    %c0_20 = arith.constant 0 : index
    %c20 = arith.constant 20 : index
    %19 = vector.load %arg1[%c0_19, %c0_20, %c20] : memref<2x4x342xf32, #tpu.memory_space<vmem>>, vector<1x4x288xf32>
    %20 = vector.shape_cast %19 : vector<1x4x288xf32> to vector<4x288xf32>
    %c20_21 = arith.constant 20 : index
    %c0_22 = arith.constant 0 : index
    %21 = vector.load %arg4[%c20_21, %c0_22] : memref<37x768xf32, #tpu.memory_space<vmem>>, vector<4x288xf32>
    tpu.vector_store %arg4[%c20_21, %c0_22], %20 {strides = array<i32>} : memref<37x768xf32, #tpu.memory_space<vmem>>, vector<4x288xf32>,
    %c0_23 = arith.constant 0 : index
    %c0_24 = arith.constant 0 : index
    %c36_25 = arith.constant 36 : index
    %22 = vector.load %arg1[%c0_23, %c0_24, %c36_25] : memref<2x4x342xf32, #tpu.memory_space<vmem>>, vector<1x4x288xf32>
    %23 = vector.shape_cast %22 : vector<1x4x288xf32> to vector<4x288xf32>
    %c24 = arith.constant 24 : index
    %c0_26 = arith.constant 0 : index
    %24 = vector.load %arg4[%c24, %c0_26] : memref<37x768xf32, #tpu.memory_space<vmem>>, vector<4x288xf32>
    tpu.vector_store %arg4[%c24, %c0_26], %23 {strides = array<i32>} : memref<37x768xf32, #tpu.memory_space<vmem>>, vector<4x288xf32>,
    %c0_27 = arith.constant 0 : index
    %c0_28 = arith.constant 0 : index
    %c37 = arith.constant 37 : index
    %25 = vector.load %arg1[%c0_27, %c0_28, %c37] : memref<2x4x342xf32, #tpu.memory_space<vmem>>, vector<1x4x288xf32>
    %26 = vector.shape_cast %25 : vector<1x4x288xf32> to vector<4x288xf32>
    %c28 = arith.constant 28 : index
    %c0_29 = arith.constant 0 : index
    %27 = vector.load %arg4[%c28, %c0_29] : memref<37x768xf32, #tpu.memory_space<vmem>>, vector<4x288xf32>
    tpu.vector_store %arg4[%c28, %c0_29], %26 {strides = array<i32>} : memref<37x768xf32, #tpu.memory_space<vmem>>, vector<4x288xf32>,
    %c0_30 = arith.constant 0 : index
    %c0_31 = arith.constant 0 : index
    %c38 = arith.constant 38 : index
    %28 = vector.load %arg1[%c0_30, %c0_31, %c38] : memref<2x4x342xf32, #tpu.memory_space<vmem>>, vector<1x4x288xf32>
    %29 = vector.shape_cast %28 : vector<1x4x288xf32> to vector<4x288xf32>
    %c32 = arith.constant 32 : index
    %c0_32 = arith.constant 0 : index
    %30 = vector.load %arg4[%c32, %c0_32] : memref<37x768xf32, #tpu.memory_space<vmem>>, vector<4x288xf32>
    tpu.vector_store %arg4[%c32, %c0_32], %29 {strides = array<i32>} : memref<37x768xf32, #tpu.memory_space<vmem>>, vector<4x288xf32>,
    %cst_33 = arith.constant 0.000000e+00 : f32
    %31 = vector.broadcast %cst_33 : f32 to vector<36x96xf32>
    %c0_34 = arith.constant 0 : index
    %c672 = arith.constant 672 : index
    %32 = vector.load %arg4[%c0_34, %c672] : memref<37x768xf32, #tpu.memory_space<vmem>>, vector<36x96xf32>
    tpu.vector_store %arg4[%c0_34, %c672], %31 {strides = array<i32>} : memref<37x768xf32, #tpu.memory_space<vmem>>, vector<36x96xf32>,
    %c1_35 = arith.constant 1 : index
    %c0_36 = arith.constant 0 : index
    %c0_37 = arith.constant 0 : index
    %33 = vector.load %arg1[%c1_35, %c0_36, %c0_37] : memref<2x4x342xf32, #tpu.memory_space<vmem>>, vector<1x4x288xf32>
    %34 = vector.shape_cast %33 : vector<1x4x288xf32> to vector<4x288xf32>
    %c0_38 = arith.constant 0 : index
    %c384 = arith.constant 384 : index
    %35 = vector.load %arg4[%c0_38, %c384] : memref<37x768xf32, #tpu.memory_space<vmem>>, vector<4x288xf32>
    tpu.vector_store %arg4[%c0_38, %c384], %34 {strides = array<i32>} : memref<37x768xf32, #tpu.memory_space<vmem>>, vector<4x288xf32>,
    %c1_39 = arith.constant 1 : index
    %c0_40 = arith.constant 0 : index
    %c1_41 = arith.constant 1 : index
    %36 = vector.load %arg1[%c1_39, %c0_40, %c1_41] : memref<2x4x342xf32, #tpu.memory_space<vmem>>, vector<1x4x288xf32>
    %37 = vector.shape_cast %36 : vector<1x4x288xf32> to vector<4x288xf32>
    %c4_42 = arith.constant 4 : index
    %c384_43 = arith.constant 384 : index
    %38 = vector.load %arg4[%c4_42, %c384_43] : memref<37x768xf32, #tpu.memory_space<vmem>>, vector<4x288xf32>
    tpu.vector_store %arg4[%c4_42, %c384_43], %37 {strides = array<i32>} : memref<37x768xf32, #tpu.memory_space<vmem>>, vector<4x288xf32>,
    %c1_44 = arith.constant 1 : index
    %c0_45 = arith.constant 0 : index
    %c2_46 = arith.constant 2 : index
    %39 = vector.load %arg1[%c1_44, %c0_45, %c2_46] : memref<2x4x342xf32, #tpu.memory_space<vmem>>, vector<1x4x288xf32>
    %40 = vector.shape_cast %39 : vector<1x4x288xf32> to vector<4x288xf32>
    %c8_47 = arith.constant 8 : index
    %c384_48 = arith.constant 384 : index
    %41 = vector.load %arg4[%c8_47, %c384_48] : memref<37x768xf32, #tpu.memory_space<vmem>>, vector<4x288xf32>
    tpu.vector_store %arg4[%c8_47, %c384_48], %40 {strides = array<i32>} : memref<37x768xf32, #tpu.memory_space<vmem>>, vector<4x288xf32>,
    %c1_49 = arith.constant 1 : index
    %c0_50 = arith.constant 0 : index
    %c18_51 = arith.constant 18 : index
    %42 = vector.load %arg1[%c1_49, %c0_50, %c18_51] : memref<2x4x342xf32, #tpu.memory_space<vmem>>, vector<1x4x288xf32>
    %43 = vector.shape_cast %42 : vector<1x4x288xf32> to vector<4x288xf32>
    %c12_52 = arith.constant 12 : index
    %c384_53 = arith.constant 384 : index
    %44 = vector.load %arg4[%c12_52, %c384_53] : memref<37x768xf32, #tpu.memory_space<vmem>>, vector<4x288xf32>
    tpu.vector_store %arg4[%c12_52, %c384_53], %43 {strides = array<i32>} : memref<37x768xf32, #tpu.memory_space<vmem>>, vector<4x288xf32>,
    %c1_54 = arith.constant 1 : index
    %c0_55 = arith.constant 0 : index
    %c19_56 = arith.constant 19 : index
    %45 = vector.load %arg1[%c1_54, %c0_55, %c19_56] : memref<2x4x342xf32, #tpu.memory_space<vmem>>, vector<1x4x288xf32>
    %46 = vector.shape_cast %45 : vector<1x4x288xf32> to vector<4x288xf32>
    %c16_57 = arith.constant 16 : index
    %c384_58 = arith.constant 384 : index
    %47 = vector.load %arg4[%c16_57, %c384_58] : memref<37x768xf32, #tpu.memory_space<vmem>>, vector<4x288xf32>
    tpu.vector_store %arg4[%c16_57, %c384_58], %46 {strides = array<i32>} : memref<37x768xf32, #tpu.memory_space<vmem>>, vector<4x288xf32>,
    %c1_59 = arith.constant 1 : index
    %c0_60 = arith.constant 0 : index
    %c20_61 = arith.constant 20 : index
    %48 = vector.load %arg1[%c1_59, %c0_60, %c20_61] : memref<2x4x342xf32, #tpu.memory_space<vmem>>, vector<1x4x288xf32>
    %49 = vector.shape_cast %48 : vector<1x4x288xf32> to vector<4x288xf32>
    %c20_62 = arith.constant 20 : index
    %c384_63 = arith.constant 384 : index
    %50 = vector.load %arg4[%c20_62, %c384_63] : memref<37x768xf32, #tpu.memory_space<vmem>>, vector<4x288xf32>
    tpu.vector_store %arg4[%c20_62, %c384_63], %49 {strides = array<i32>} : memref<37x768xf32, #tpu.memory_space<vmem>>, vector<4x288xf32>,
    %c1_64 = arith.constant 1 : index
    %c0_65 = arith.constant 0 : index
    %c36_66 = arith.constant 36 : index
    %51 = vector.load %arg1[%c1_64, %c0_65, %c36_66] : memref<2x4x342xf32, #tpu.memory_space<vmem>>, vector<1x4x288xf32>
    %52 = vector.shape_cast %51 : vector<1x4x288xf32> to vector<4x288xf32>
    %c24_67 = arith.constant 24 : index
    %c384_68 = arith.constant 384 : index
    %53 = vector.load %arg4[%c24_67, %c384_68] : memref<37x768xf32, #tpu.memory_space<vmem>>, vector<4x288xf32>
    tpu.vector_store %arg4[%c24_67, %c384_68], %52 {strides = array<i32>} : memref<37x768xf32, #tpu.memory_space<vmem>>, vector<4x288xf32>,
    %c1_69 = arith.constant 1 : index
    %c0_70 = arith.constant 0 : index
    %c37_71 = arith.constant 37 : index
    %54 = vector.load %arg1[%c1_69, %c0_70, %c37_71] : memref<2x4x342xf32, #tpu.memory_space<vmem>>, vector<1x4x288xf32>
    %55 = vector.shape_cast %54 : vector<1x4x288xf32> to vector<4x288xf32>
    %c28_72 = arith.constant 28 : index
    %c384_73 = arith.constant 384 : index
    %56 = vector.load %arg4[%c28_72, %c384_73] : memref<37x768xf32, #tpu.memory_space<vmem>>, vector<4x288xf32>
    tpu.vector_store %arg4[%c28_72, %c384_73], %55 {strides = array<i32>} : memref<37x768xf32, #tpu.memory_space<vmem>>, vector<4x288xf32>,
    %c1_74 = arith.constant 1 : index
    %c0_75 = arith.constant 0 : index
    %c38_76 = arith.constant 38 : index
    %57 = vector.load %arg1[%c1_74, %c0_75, %c38_76] : memref<2x4x342xf32, #tpu.memory_space<vmem>>, vector<1x4x288xf32>
    %58 = vector.shape_cast %57 : vector<1x4x288xf32> to vector<4x288xf32>
    %c32_77 = arith.constant 32 : index
    %c384_78 = arith.constant 384 : index
    %59 = vector.load %arg4[%c32_77, %c384_78] : memref<37x768xf32, #tpu.memory_space<vmem>>, vector<4x288xf32>
    tpu.vector_store %arg4[%c32_77, %c384_78], %58 {strides = array<i32>} : memref<37x768xf32, #tpu.memory_space<vmem>>, vector<4x288xf32>,
    %c0_79 = arith.constant 0 : index
    %c0_80 = arith.constant 0 : index
    %60 = vector.load %arg2[%c0_79, %c0_80] : memref<8x37xf32, #tpu.memory_space<vmem>>, vector<8x37xf32>
    %c0_81 = arith.constant 0 : index
    %c0_82 = arith.constant 0 : index
    %61 = vector.load %arg4[%c0_81, %c0_82] : memref<37x768xf32, #tpu.memory_space<vmem>>, vector<37x768xf32>
    %cst_83 = arith.constant dense<0.000000e+00> : vector<8x768xf32>
    %62 = tpu.matmul %60, %61, %cst_83 {dimension_numbers = #tpu.dot_dimension_numbers<[1], [0], [0], [1], [0, 0, 1, 1], [], []>} : vector<8x37xf32>, vector<37x768xf32>, vector<8x768xf32> -> vector<8x768xf32>
    %63 = vector.extract_strided_slice %62 {offsets = [0, 0], sizes = [8, 288], strides = [1, 1]} : vector<8x768xf32> to vector<8x288xf32>
    %c0_84 = arith.constant 0 : index
    %c0_85 = arith.constant 0 : index
    %c0_86 = arith.constant 0 : index
    %64 = vector.load %arg3[%c0_84, %c0_85, %c0_86] : memref<2x8x288xf32, #tpu.memory_space<vmem>>, vector<1x8x288xf32>
    %65 = vector.shape_cast %64 : vector<1x8x288xf32> to vector<8x288xf32>
    %66 = vector.shape_cast %63 : vector<8x288xf32> to vector<1x8x288xf32>
    tpu.vector_store %arg3[%c0_84, %c0_85, %c0_86], %66 {strides = array<i32>} : memref<2x8x288xf32, #tpu.memory_space<vmem>>, vector<1x8x288xf32>,
    %67 = vector.extract_strided_slice %62 {offsets = [0, 384], sizes = [8, 288], strides = [1, 1]} : vector<8x768xf32> to vector<8x288xf32>
    %c1_87 = arith.constant 1 : index
    %c0_88 = arith.constant 0 : index
    %c0_89 = arith.constant 0 : index
    %68 = vector.load %arg3[%c1_87, %c0_88, %c0_89] : memref<2x8x288xf32, #tpu.memory_space<vmem>>, vector<1x8x288xf32>
    %69 = vector.shape_cast %68 : vector<1x8x288xf32> to vector<8x288xf32>
    %70 = vector.shape_cast %67 : vector<8x288xf32> to vector<1x8x288xf32>
    tpu.vector_store %arg3[%c1_87, %c0_88, %c0_89], %70 {strides = array<i32>} : memref<2x8x288xf32, #tpu.memory_space<vmem>>, vector<1x8x288xf32>,
    return
  }
  func.func @transform_0(%arg0: i32) -> (i32, i32, i32) {
    %c0_i32 = arith.constant 0 : i32
    %c0_i32_0 = arith.constant 0 : i32
    %c0_i32_1 = arith.constant 0 : i32
    return %arg0, %c0_i32, %c0_i32_0 : i32, i32, i32
  }
  func.func @transform_1(%arg0: i32) -> (i32, i32) {
    %c0_i32 = arith.constant 0 : i32
    %c0_i32_0 = arith.constant 0 : i32
    %c0_i32_1 = arith.constant 0 : i32
    return %c0_i32, %c0_i32_0 : i32, i32
  }
  func.func @transform_2(%arg0: i32) -> (i32, i32, i32) {
    %c0_i32 = arith.constant 0 : i32
    %c0_i32_0 = arith.constant 0 : i32
    %c0_i32_1 = arith.constant 0 : i32
    return %arg0, %c0_i32, %c0_i32_0 : i32, i32, i32
  }
}

</mosaic_0001>

<llo_original>
// kernel: tpu_custom_call.1
$region0: #{tpu_custom_call.1}
  #allocation0 [shape = 'u32[]', space=smem, size = 0x4, offset = 0x4, fixed_abs, tag = 'smem constant byte address 0x4 - core index']
  #allocation1 [shape = 'u32[144,128]{1,0:T(1,128)}', space=vmem, size = 0x12000, scoped, tag = 'internal scratch']
  #allocation2 [shape = 'f32[37,768]{1,0:T(8,128)}', space=vmem, size = 0x1e000, scoped, tag = 'scratch operand']
  %s0 = inlined_call_operand.hbm [shape: f32[2,4,342], index: 0, kind: input, shape index: {}]
  %s1 = inlined_call_operand.hbm [shape: f32[8,37], index: 1, kind: input, shape index: {}]
  %s2 = inlined_call_operand.hbm [shape: f32[2,8,288], index: 2, kind: output, shape index: {}]
  %s3 = sld [smem:[#allocation0]]
  $region26: #{tpu_custom_call.1} parent=0
    _
  %s5 = ssub.s32 1, %s3
  %s6 = scalar_select 0, %s5, %s3
  $region1: #{tpu_custom_call.1} parent=0
    #allocation3 [shape = 'u8[12288]{0}', space=vmem, size = 0x3000, scoped, tag = 'input window, operand 0, single buffered']
    #allocation4 [shape = 's32[1]{0}', space=sflag, size = 0x4, scoped, tag = 'scoped memory for tpu_custom_call.1']
    #allocation5 [shape = 's32[1]{0}', space=sflag, size = 0x4, scoped, tag = 'scoped memory for tpu_custom_call.1']
    #allocation6 [shape = 'u8[4096]{0}', space=vmem, size = 0x1000, scoped, tag = 'input window, operand 1, single buffered']
    #allocation7 [shape = 's32[1]{0}', space=sflag, size = 0x4, scoped, tag = 'scoped memory for tpu_custom_call.1']
    #allocation8 [shape = 'u8[24576]{0}', space=vmem, size = 0x6000, scoped, tag = 'output window, operand 0, single buffered']
    %7 = vsyncpa [#allocation4], 0
    %8 = vsyncpa [#allocation7], 0
    %9 = vsyncpa [#allocation5], 0
    // Predicated region
    $region2: #{tpu_custom_call.1} parent=1 // pred_check
      _
    $region3: #{tpu_custom_call.1} parent=1 // pred_check_branch
      %11 = sbr.rel (0) target = $region5
    $region4: #{tpu_custom_call.1} parent=1 // pred_region
      %s13 = ssub.s32 384, 384
      %14 = vsyncadd [#allocation4], %s13
      %s15 = sshll.u32 [#allocation3], 4
      %s16 = int_to_ptr.vmem [resolvable:$true] %s15
      %21 = dma.hbm_to_vmem [thread:$0]  %s0, 384, %s16, [#allocation4], 192, 192, 12
    $region5: #{tpu_custom_call.1} parent=1 // pred_fallthru
      _
    // Predicated region
    $region6: #{tpu_custom_call.1} parent=1 // pred_check
      _
    $region7: #{tpu_custom_call.1} parent=1 // pred_check_branch
      %23 = sbr.rel (0) target = $region9
    $region8: #{tpu_custom_call.1} parent=1 // pred_region
      %s25 = ssub.s32 128, 128
      %26 = vsyncadd [#allocation7], %s25
      %s28 = sshll.u32 [#allocation6], 4
      %s29 = int_to_ptr.vmem [resolvable:$true] %s28
      %31 = dma.hbm_to_vmem [thread:$0]  %s1, 128, %s29, [#allocation7]
    $region9: #{tpu_custom_call.1} parent=1 // pred_fallthru
      _
    // Predicated region
    $region10: #{tpu_custom_call.1} parent=1 // pred_check
      _
    $region11: #{tpu_custom_call.1} parent=1 // pred_check_branch
      %33 = sbr.rel (0) target = $region13
    $region12: #{tpu_custom_call.1} parent=1 // pred_region
      %34 = dma.done [#allocation4], 384
    $region13: #{tpu_custom_call.1} parent=1 // pred_fallthru
      _
    // Predicated region
    $region14: #{tpu_custom_call.1} parent=1 // pred_check
      _
    $region15: #{tpu_custom_call.1} parent=1 // pred_check_branch
      %36 = sbr.rel (0) target = $region17
    $region16: #{tpu_custom_call.1} parent=1 // pred_region
      %37 = dma.done [#allocation7], 128
    $region17: #{tpu_custom_call.1} parent=1 // pred_fallthru
      _
    %v38 = vlaneseq
    %vm39 = vcmp.ge.s32.totalorder %v38, 0
    %vm40 = vcmp.lt.s32.totalorder %v38, 768
    %vm41 = vmand %vm39, %vm40
    %s42 = scalar_lea.vmem [#allocation2], 196
    %43 = vst.msk [vmem:[%s42] ss:$8 sm:$0xf] %vm41, 1.0
    %44 = vst.msk [vmem:[%s42] ss:$8 sm:$0x30] %vm41, 1.0
    %vm45 = vcmask 1047808
    %46 = vst.msk [vmem:[#allocation2 + $0x10] sm:$0xff] %vm45, 0.0
    %47 = vst.msk [vmem:[#allocation2 + $0x40] sm:$0xff] %vm45, 0.0
    %48 = vst.msk [vmem:[#allocation2 + $0x70] sm:$0xff] %vm45, 0.0
    %49 = vst.msk [vmem:[#allocation2 + $0xa0] sm:$0xff] %vm45, 0.0
    %vm50 = vcmask 1043712
    %51 = vst.msk [vmem:[#allocation2 + $0xd0] sm:$0xf] %vm50, 0.0
    %v52 = vld [vmem:[#allocation3] sm:$0xff]
    %v53 = vld [vmem:[#allocation3 + $0x8] sm:$0xf]
    %v55 = vcombine.high %v52, %v52
    %57 = vst [vmem:[#allocation2] sm:$0xf] %v52
    %58 = vst [vmem:[#allocation2 + $0x8] sm:$0xf] %v55
    %vm59 = vcmask 257024
    %60 = vst.msk [vmem:[#allocation2 + $0x10] sm:$0xf] %vm59, %v53
    %v61 = vld [vmem:[#allocation3] sm:$0xff]
    %v62 = vld [vmem:[#allocation3 + $0x8] sm:$0xf]
    %v65 = vcombine.low %v61, %v61
    %v66 = vcombine.low %v62, %v62
    %67 = vrot.lane.b32.xlu0 %v65, 127
    %v68 = vpop.permute.xlu0 %67
    %69 = vrot.lane.b32.xlu0 %v61, 127
    %v70 = vpop.permute.xlu0 %69
    %71 = vrot.lane.b32.xlu0 %v66, 127
    %v72 = vpop.permute.xlu0 %71
    %vm73 = vcmask 1039360
    %v74 = vsel %vm73, %v68, %v70
    %v75 = vsel %vm73, %v70, %v72
    %79 = vst [vmem:[#allocation2] sm:$0xf0] %v74
    %80 = vst [vmem:[#allocation2 + $0x8] sm:$0xf0] %v75
    %vm81 = vcmask 261124
    %82 = vst.msk [vmem:[#allocation2 + $0x10] sm:$0xf0] %vm81, %v72
    %v83 = vld [vmem:[#allocation3] sm:$0xff]
    %v84 = vld [vmem:[#allocation3 + $0x8] sm:$0xf]
    %v87 = vcombine.high %v83, %v83
    %88 = vrot.lane.b32.xlu0 %v83, 126
    %v89 = vpop.permute.xlu0 %88
    %90 = vrot.lane.b32.xlu0 %v87, 126
    %v91 = vpop.permute.xlu0 %90
    %92 = vrot.lane.b32.xlu0 %v84, 126
    %v93 = vpop.permute.xlu0 %92
    %vm94 = vcmask 1031168
    %v95 = vsel %vm94, %v89, %v91
    %v96 = vsel %vm94, %v91, %v93
    %100 = vst [vmem:[#allocation2 + $0x30] sm:$0xf] %v95
    %101 = vst [vmem:[#allocation2 + $0x38] sm:$0xf] %v96
    %102 = vst.msk [vmem:[#allocation2 + $0x40] sm:$0xf] %vm59, %v93
    %v103 = vld [vmem:[#allocation3] sm:$0xff]
    %v104 = vld [vmem:[#allocation3 + $0x8] sm:$0xf]
    %v107 = vcombine.low %v103, %v103
    %v108 = vcombine.low %v104, %v104
    %109 = vrot.lane.b32.xlu0 %v107, 110
    %v110 = vpop.permute.xlu0 %109
    %111 = vrot.lane.b32.xlu0 %v103, 110
    %v112 = vpop.permute.xlu0 %111
    %113 = vrot.lane.b32.xlu0 %v108, 110
    %v114 = vpop.permute.xlu0 %113
    %vm115 = vcmask 900096
    %v116 = vsel %vm115, %v110, %v112
    %v117 = vsel %vm115, %v112, %v114
    %121 = vst [vmem:[#allocation2 + $0x30] sm:$0xf0] %v116
    %122 = vst [vmem:[#allocation2 + $0x38] sm:$0xf0] %v117
    %123 = vst.msk [vmem:[#allocation2 + $0x40] sm:$0xf0] %vm81, %v114
    %v124 = vld [vmem:[#allocation3] sm:$0xff]
    %v125 = vld [vmem:[#allocation3 + $0x8] sm:$0xf]
    %v128 = vcombine.high %v124, %v124
    %129 = vrot.lane.b32.xlu0 %v124, 109
    %v130 = vpop.permute.xlu0 %129
    %131 = vrot.lane.b32.xlu0 %v128, 109
    %v132 = vpop.permute.xlu0 %131
    %133 = vrot.lane.b32.xlu0 %v125, 109
    %v134 = vpop.permute.xlu0 %133
    %vm135 = vcmask 891904
    %v136 = vsel %vm135, %v130, %v132
    %v137 = vsel %vm135, %v132, %v134
    %141 = vst [vmem:[#allocation2 + $0x60] sm:$0xf] %v136
    %142 = vst [vmem:[#allocation2 + $0x68] sm:$0xf] %v137
    %143 = vst.msk [vmem:[#allocation2 + $0x70] sm:$0xf] %vm59, %v134
    %v144 = vld [vmem:[#allocation3] sm:$0xff]
    %v145 = vld [vmem:[#allocation3 + $0x8] sm:$0xf]
    %v148 = vcombine.low %v144, %v144
    %v149 = vcombine.low %v145, %v145
    %150 = vrot.lane.b32.xlu0 %v148, 108
    %v151 = vpop.permute.xlu0 %150
    %152 = vrot.lane.b32.xlu0 %v144, 108
    %v153 = vpop.permute.xlu0 %152
    %154 = vrot.lane.b32.xlu0 %v149, 108
    %v155 = vpop.permute.xlu0 %154
    %vm156 = vcmask 883712
    %v157 = vsel %vm156, %v151, %v153
    %v158 = vsel %vm156, %v153, %v155
    %162 = vst [vmem:[#allocation2 + $0x60] sm:$0xf0] %v157
    %163 = vst [vmem:[#allocation2 + $0x68] sm:$0xf0] %v158
    %164 = vst.msk [vmem:[#allocation2 + $0x70] sm:$0xf0] %vm81, %v155
    %v165 = vld [vmem:[#allocation3] sm:$0xff]
    %v166 = vld [vmem:[#allocation3 + $0x8] sm:$0xf]
    %v169 = vcombine.high %v165, %v165
    %170 = vrot.lane.b32.xlu0 %v165, 92
    %v171 = vpop.permute.xlu0 %170
    %172 = vrot.lane.b32.xlu0 %v169, 92
    %v173 = vpop.permute.xlu0 %172
    %174 = vrot.lane.b32.xlu0 %v166, 92
    %v175 = vpop.permute.xlu0 %174
    %vm176 = vcmask 752640
    %v177 = vsel %vm176, %v171, %v173
    %v178 = vsel %vm176, %v173, %v175
    %182 = vst [vmem:[#allocation2 + $0x90] sm:$0xf] %v177
    %183 = vst [vmem:[#allocation2 + $0x98] sm:$0xf] %v178
    %184 = vst.msk [vmem:[#allocation2 + $0xa0] sm:$0xf] %vm59, %v175
    %v185 = vld [vmem:[#allocation3] sm:$0xff]
    %v186 = vld [vmem:[#allocation3 + $0x8] sm:$0xf]
    %v189 = vcombine.low %v185, %v185
    %v190 = vcombine.low %v186, %v186
    %191 = vrot.lane.b32.xlu0 %v189, 91
    %v192 = vpop.permute.xlu0 %191
    %193 = vrot.lane.b32.xlu0 %v185, 91
    %v194 = vpop.permute.xlu0 %193
    %195 = vrot.lane.b32.xlu0 %v190, 91
    %v196 = vpop.permute.xlu0 %195
    %vm197 = vcmask 744448
    %v198 = vsel %vm197, %v192, %v194
    %v199 = vsel %vm197, %v194, %v196
    %203 = vst [vmem:[#allocation2 + $0x90] sm:$0xf0] %v198
    %204 = vst [vmem:[#allocation2 + $0x98] sm:$0xf0] %v199
    %205 = vst.msk [vmem:[#allocation2 + $0xa0] sm:$0xf0] %vm81, %v196
    %v206 = vld [vmem:[#allocation3] sm:$0xff]
    %v207 = vld [vmem:[#allocation3 + $0x8] sm:$0xf]
    %v210 = vcombine.high %v206, %v206
    %211 = vrot.lane.b32.xlu0 %v206, 90
    %v212 = vpop.permute.xlu0 %211
    %213 = vrot.lane.b32.xlu0 %v210, 90
    %v214 = vpop.permute.xlu0 %213
    %215 = vrot.lane.b32.xlu0 %v207, 90
    %v216 = vpop.permute.xlu0 %215
    %vm217 = vcmask 736256
    %v218 = vsel %vm217, %v212, %v214
    %v219 = vsel %vm217, %v214, %v216
    %223 = vst [vmem:[#allocation2 + $0xc0] sm:$0xf] %v218
    %224 = vst [vmem:[#allocation2 + $0xc8] sm:$0xf] %v219
    %225 = vst.msk [vmem:[#allocation2 + $0xd0] sm:$0xf] %vm59, %v216
    %226 = vst.msk [vmem:[#allocation2 + $0x28] sm:$0xff] %vm45, 0.0
    %227 = vst.msk [vmem:[#allocation2 + $0x58] sm:$0xff] %vm45, 0.0
    %228 = vst.msk [vmem:[#allocation2 + $0x88] sm:$0xff] %vm45, 0.0
    %229 = vst.msk [vmem:[#allocation2 + $0xb8] sm:$0xff] %vm45, 0.0
    %230 = vst.msk [vmem:[#allocation2 + $0xe8] sm:$0xf] %vm50, 0.0
    %s231 = scalar_lea.vmem [#allocation3], 12
    %v232 = vld [vmem:[%s231] sm:$0xff]
    %v233 = vld [vmem:[%s231 + $0x8] sm:$0xf]
    %v235 = vcombine.high %v232, %v232
    %237 = vst [vmem:[#allocation2 + $0x18] sm:$0xf] %v232
    %238 = vst [vmem:[#allocation2 + $0x20] sm:$0xf] %v235
    %239 = vst.msk [vmem:[#allocation2 + $0x28] sm:$0xf] %vm59, %v233
    %v240 = vld [vmem:[%s231] sm:$0xff]
    %v241 = vld [vmem:[%s231 + $0x8] sm:$0xf]
    %v244 = vcombine.low %v240, %v240
    %v245 = vcombine.low %v241, %v241
    %246 = vrot.lane.b32.xlu0 %v244, 127
    %v247 = vpop.permute.xlu0 %246
    %248 = vrot.lane.b32.xlu0 %v240, 127
    %v249 = vpop.permute.xlu0 %248
    %250 = vrot.lane.b32.xlu0 %v245, 127
    %v251 = vpop.permute.xlu0 %250
    %v252 = vsel %vm73, %v247, %v249
    %v253 = vsel %vm73, %v249, %v251
    %257 = vst [vmem:[#allocation2 + $0x18] sm:$0xf0] %v252
    %258 = vst [vmem:[#allocation2 + $0x20] sm:$0xf0] %v253
    %259 = vst.msk [vmem:[#allocation2 + $0x28] sm:$0xf0] %vm81, %v251
    %v260 = vld [vmem:[%s231] sm:$0xff]
    %v261 = vld [vmem:[%s231 + $0x8] sm:$0xf]
    %v264 = vcombine.high %v260, %v260
    %265 = vrot.lane.b32.xlu0 %v260, 126
    %v266 = vpop.permute.xlu0 %265
    %267 = vrot.lane.b32.xlu0 %v264, 126
    %v268 = vpop.permute.xlu0 %267
    %269 = vrot.lane.b32.xlu0 %v261, 126
    %v270 = vpop.permute.xlu0 %269
    %v271 = vsel %vm94, %v266, %v268
    %v272 = vsel %vm94, %v268, %v270
    %276 = vst [vmem:[#allocation2 + $0x48] sm:$0xf] %v271
    %277 = vst [vmem:[#allocation2 + $0x50] sm:$0xf] %v272
    %278 = vst.msk [vmem:[#allocation2 + $0x58] sm:$0xf] %vm59, %v270
    %v279 = vld [vmem:[%s231] sm:$0xff]
    %v280 = vld [vmem:[%s231 + $0x8] sm:$0xf]
    %v283 = vcombine.low %v279, %v279
    %v284 = vcombine.low %v280, %v280
    %285 = vrot.lane.b32.xlu0 %v283, 110
    %v286 = vpop.permute.xlu0 %285
    %287 = vrot.lane.b32.xlu0 %v279, 110
    %v288 = vpop.permute.xlu0 %287
    %289 = vrot.lane.b32.xlu0 %v284, 110
    %v290 = vpop.permute.xlu0 %289
    %v291 = vsel %vm115, %v286, %v288
    %v292 = vsel %vm115, %v288, %v290
    %296 = vst [vmem:[#allocation2 + $0x48] sm:$0xf0] %v291
    %297 = vst [vmem:[#allocation2 + $0x50] sm:$0xf0] %v292
    %298 = vst.msk [vmem:[#allocation2 + $0x58] sm:$0xf0] %vm81, %v290
    %v299 = vld [vmem:[%s231] sm:$0xff]
    %v300 = vld [vmem:[%s231 + $0x8] sm:$0xf]
    %v303 = vcombine.high %v299, %v299
    %304 = vrot.lane.b32.xlu0 %v299, 109
    %v305 = vpop.permute.xlu0 %304
    %306 = vrot.lane.b32.xlu0 %v303, 109
    %v307 = vpop.permute.xlu0 %306
    %308 = vrot.lane.b32.xlu0 %v300, 109
    %v309 = vpop.permute.xlu0 %308
    %v310 = vsel %vm135, %v305, %v307
    %v311 = vsel %vm135, %v307, %v309
    %315 = vst [vmem:[#allocation2 + $0x78] sm:$0xf] %v310
    %316 = vst [vmem:[#allocation2 + $0x80] sm:$0xf] %v311
    %317 = vst.msk [vmem:[#allocation2 + $0x88] sm:$0xf] %vm59, %v309
    %v318 = vld [vmem:[%s231] sm:$0xff]
    %v319 = vld [vmem:[%s231 + $0x8] sm:$0xf]
    %v322 = vcombine.low %v318, %v318
    %v323 = vcombine.low %v319, %v319
    %324 = vrot.lane.b32.xlu0 %v322, 108
    %v325 = vpop.permute.xlu0 %324
    %326 = vrot.lane.b32.xlu0 %v318, 108
    %v327 = vpop.permute.xlu0 %326
    %328 = vrot.lane.b32.xlu0 %v323, 108
    %v329 = vpop.permute.xlu0 %328
    %v330 = vsel %vm156, %v325, %v327
    %v331 = vsel %vm156, %v327, %v329
    %335 = vst [vmem:[#allocation2 + $0x78] sm:$0xf0] %v330
    %336 = vst [vmem:[#allocation2 + $0x80] sm:$0xf0] %v331
    %337 = vst.msk [vmem:[#allocation2 + $0x88] sm:$0xf0] %vm81, %v329
    %v338 = vld [vmem:[%s231] sm:$0xff]
    %v339 = vld [vmem:[%s231 + $0x8] sm:$0xf]
    %v342 = vcombine.high %v338, %v338
    %343 = vrot.lane.b32.xlu0 %v338, 92
    %v344 = vpop.permute.xlu0 %343
    %345 = vrot.lane.b32.xlu0 %v342, 92
    %v346 = vpop.permute.xlu0 %345
    %347 = vrot.lane.b32.xlu0 %v339, 92
    %v348 = vpop.permute.xlu0 %347
    %v349 = vsel %vm176, %v344, %v346
    %v350 = vsel %vm176, %v346, %v348
    %354 = vst [vmem:[#allocation2 + $0xa8] sm:$0xf] %v349
    %355 = vst [vmem:[#allocation2 + $0xb0] sm:$0xf] %v350
    %356 = vst.msk [vmem:[#allocation2 + $0xb8] sm:$0xf] %vm59, %v348
    %v357 = vld [vmem:[%s231] sm:$0xff]
    %v358 = vld [vmem:[%s231 + $0x8] sm:$0xf]
    %v361 = vcombine.low %v357, %v357
    %v362 = vcombine.low %v358, %v358
    %363 = vrot.lane.b32.xlu0 %v361, 91
    %v364 = vpop.permute.xlu0 %363
    %365 = vrot.lane.b32.xlu0 %v357, 91
    %v366 = vpop.permute.xlu0 %365
    %367 = vrot.lane.b32.xlu0 %v362, 91
    %v368 = vpop.permute.xlu0 %367
    %v369 = vsel %vm197, %v364, %v366
    %v370 = vsel %vm197, %v366, %v368
    %374 = vst [vmem:[#allocation2 + $0xa8] sm:$0xf0] %v369
    %375 = vst [vmem:[#allocation2 + $0xb0] sm:$0xf0] %v370
    %376 = vst.msk [vmem:[#allocation2 + $0xb8] sm:$0xf0] %vm81, %v368
    %v377 = vld [vmem:[%s231] sm:$0xff]
    %v378 = vld [vmem:[%s231 + $0x8] sm:$0xf]
    %v381 = vcombine.high %v377, %v377
    %382 = vrot.lane.b32.xlu0 %v377, 90
    %v383 = vpop.permute.xlu0 %382
    %384 = vrot.lane.b32.xlu0 %v381, 90
    %v385 = vpop.permute.xlu0 %384
    %386 = vrot.lane.b32.xlu0 %v378, 90
    %v387 = vpop.permute.xlu0 %386
    %v388 = vsel %vm217, %v383, %v385
    %v389 = vsel %vm217, %v385, %v387
    %393 = vst [vmem:[#allocation2 + $0xd8] sm:$0xf] %v388
    %394 = vst [vmem:[#allocation2 + $0xe0] sm:$0xf] %v389
    %395 = vst.msk [vmem:[#allocation2 + $0xe8] sm:$0xf] %vm59, %v387
    %v396 = vld [vmem:[#allocation6] sm:$0xff]
    %v397 = vld [vmem:[#allocation2] sm:$0xff]
    %v398 = vld [vmem:[#allocation2 + $0x8] sm:$0xff]
    %v399 = vld [vmem:[#allocation2 + $0x10] sm:$0xff]
    %v400 = vld [vmem:[#allocation2 + $0x18] sm:$0xff]
    %v401 = vld [vmem:[#allocation2 + $0x20] sm:$0xff]
    %v402 = vld [vmem:[#allocation2 + $0x28] sm:$0xff]
    %v403 = vld [vmem:[#allocation2 + $0x30] sm:$0xff]
    %v404 = vld [vmem:[#allocation2 + $0x38] sm:$0xff]
    %v405 = vld [vmem:[#allocation2 + $0x40] sm:$0xff]
    %v406 = vld [vmem:[#allocation2 + $0x48] sm:$0xff]
    %v407 = vld [vmem:[#allocation2 + $0x50] sm:$0xff]
    %v408 = vld [vmem:[#allocation2 + $0x58] sm:$0xff]
    %v409 = vld [vmem:[#allocation2 + $0x60] sm:$0xff]
    %v410 = vld [vmem:[#allocation2 + $0x68] sm:$0xff]
    %v411 = vld [vmem:[#allocation2 + $0x70] sm:$0xff]
    %v412 = vld [vmem:[#allocation2 + $0x78] sm:$0xff]
    %v413 = vld [vmem:[#allocation2 + $0x80] sm:$0xff]
    %v414 = vld [vmem:[#allocation2 + $0x88] sm:$0xff]
    %v415 = vld [vmem:[#allocation2 + $0x90] sm:$0xff]
    %v416 = vld [vmem:[#allocation2 + $0x98] sm:$0xff]
    %v417 = vld [vmem:[#allocation2 + $0xa0] sm:$0xff]
    %v418 = vld [vmem:[#allocation2 + $0xa8] sm:$0xff]
    %v419 = vld [vmem:[#allocation2 + $0xb0] sm:$0xff]
    %v420 = vld [vmem:[#allocation2 + $0xb8] sm:$0xff]
    %v421 = vld [vmem:[#allocation2 + $0xc0] sm:$0x1f]
    %v422 = vld [vmem:[#allocation2 + $0xc8] sm:$0x1f]
    %v423 = vld [vmem:[#allocation2 + $0xd0] sm:$0x1f]
    %v424 = vld [vmem:[#allocation2 + $0xd8] sm:$0x1f]
    %v425 = vld [vmem:[#allocation2 + $0xe0] sm:$0x1f]
    %v426 = vld [vmem:[#allocation2 + $0xe8] sm:$0x1f]
    %vm427 = vcmask 302080
    %v429 = vsel %vm427, %v396, 0
    %vm431 = vcmask 1044480
    %v433 = vsel %vm431, %v421, 0
    %v436 = vsel %vm431, %v422, 0
    %v439 = vsel %vm431, %v423, 0
    %v442 = vsel %vm431, %v424, 0
    %v445 = vsel %vm431, %v425, 0
    %v448 = vsel %vm431, %v426, 0
    %450 = vmatprep.subr.mxu0 %v398
    %451 = vmatpush1.msra.mxu0 %v397
    %452 = vmatprep.subr.mxu0 %v404
    %453 = vmatpush1.msra.mxu0 %v403
    %454 = vmatprep.subr.mxu0 %v410
    %455 = vmatpush1.msra.mxu0 %v409
    %456 = vmatprep.subr.mxu0 %v416
    %457 = vmatpush1.msra.mxu0 %v415
    %458 = vmatprep.subr.mxu0 %v436
    %459 = vmatpush1.msra.mxu0 %v433
    %460 = vmatprep.subr.mxu0 0.0
    %461 = vmatpush1.msra.mxu0 0.0
    %462 = vmatprep.subr.mxu0 0.0
    %463 = vmatpush1.msra.mxu0 0.0
    %464 = vmatprep.subr.mxu0 0.0
    %465 = vmatpush1.msra.mxu0 0.0
    %466 = vmatprep.subr.mxu0 0.0
    %467 = vmatpush1.msra.mxu0 0.0
    %468 = vmatprep.subr.mxu0 0.0
    %469 = vmatpush1.msra.mxu0 0.0
    %470 = vmatprep.subr.mxu0 0.0
    %471 = vmatpush1.msra.mxu0 0.0
    %472 = vmatprep.subr.mxu0 0.0
    %473 = vmatpush1.msra.mxu0 0.0
    %474 = vmatprep.subr.mxu0 0.0
    %475 = vmatpush1.msra.mxu0 0.0
    %476 = vmatprep.subr.mxu0 0.0
    %477 = vmatpush1.msra.mxu0 0.0
    %478 = vmatprep.subr.mxu0 0.0
    %479 = vmatpush1.msra.mxu0 0.0
    %480 = vmatprep.subr.mxu0 0.0
    %481 = vmatpush1.msra.mxu0 0.0
    %482 = vmatprep.subr.mxu0 0.0
    %483 = vmatpush1.msra.mxu0 0.0
    %484 = vmatprep.subr.mxu0 0.0
    %485 = vmatpush1.msra.mxu0 0.0
    %486 = vmatprep.subr.mxu0 0.0
    %487 = vmatpush1.msra.mxu0 0.0
    %488 = vmatprep.subr.mxu0 0.0
    %489 = vmatpush1.msra.mxu0 0.0
    %490 = vmatprep.subr.mxu0 0.0
    %491 = vmatpush1.msra.mxu0 0.0
    %492 = vmatprep.subr.mxu0 0.0
    %493 = vmatpush1.msra.mxu0 0.0
    %494 = vmatprep.subr.mxu0 0.0
    %495 = vmatpush1.msra.mxu0 0.0
    %496 = vmatprep.subr.mxu0 0.0
    %497 = vmatpush1.msra.mxu0 0.0
    %498 = vmatprep.subr.mxu0 0.0
    %499 = vmatpush1.msra.mxu0 0.0
    %500 = vmatprep.subr.mxu0 0.0
    %501 = vmatpush1.msra.mxu0 0.0
    %502 = vmatprep.subr.mxu0 0.0
    %503 = vmatpush1.msra.mxu0 0.0
    %504 = vmatprep.subr.mxu0 0.0
    %505 = vmatpush1.msra.mxu0 0.0
    %506 = vmatprep.subr.mxu0 0.0
    %507 = vmatpush1.msra.mxu0 0.0
    %508 = vmatprep.subr.mxu0 0.0
    %509 = vmatpush1.msra.mxu0 0.0
    %510 = vmatprep.subr.mxu0 0.0
    %511 = vmatpush1.msra.mxu0 0.0
    %512 = vmatprep.subr.mxu0 0.0
    %513 = vmatpush1.msra.mxu0 0.0
    %514 = vmatprep.mubr.f32.mxu0 0.0
    %515 = vmatmul.mubr.f32.gmra.mrb[0].mxu0 %v429
    %v516 = vpop.f32.mrb[0].mxu0
    %v517 = vadd.f32 0.0, %v516
    %v518 = vpop.f32.mrb[0].mxu0
    %v519 = vadd.f32 0.0, %v518
    %520 = vdwg.mxu0
    %521 = vmatprep.subr.mxu0 %v400
    %522 = vmatpush1.msra.mxu0 %v399
    %523 = vmatprep.subr.mxu0 %v406
    %524 = vmatpush1.msra.mxu0 %v405
    %525 = vmatprep.subr.mxu0 %v412
    %526 = vmatpush1.msra.mxu0 %v411
    %527 = vmatprep.subr.mxu0 %v418
    %528 = vmatpush1.msra.mxu0 %v417
    %529 = vmatprep.subr.mxu0 %v442
    %530 = vmatpush1.msra.mxu0 %v439
    %531 = vmatprep.subr.mxu0 0.0
    %532 = vmatpush1.msra.mxu0 0.0
    %533 = vmatprep.subr.mxu0 0.0
    %534 = vmatpush1.msra.mxu0 0.0
    %535 = vmatprep.subr.mxu0 0.0
    %536 = vmatpush1.msra.mxu0 0.0
    %537 = vmatprep.subr.mxu0 0.0
    %538 = vmatpush1.msra.mxu0 0.0
    %539 = vmatprep.subr.mxu0 0.0
    %540 = vmatpush1.msra.mxu0 0.0
    %541 = vmatprep.subr.mxu0 0.0
    %542 = vmatpush1.msra.mxu0 0.0
    %543 = vmatprep.subr.mxu0 0.0
    %544 = vmatpush1.msra.mxu0 0.0
    %545 = vmatprep.subr.mxu0 0.0
    %546 = vmatpush1.msra.mxu0 0.0
    %547 = vmatprep.subr.mxu0 0.0
    %548 = vmatpush1.msra.mxu0 0.0
    %549 = vmatprep.subr.mxu0 0.0
    %550 = vmatpush1.msra.mxu0 0.0
    %551 = vmatprep.subr.mxu0 0.0
    %552 = vmatpush1.msra.mxu0 0.0
    %553 = vmatprep.subr.mxu0 0.0
    %554 = vmatpush1.msra.mxu0 0.0
    %555 = vmatprep.subr.mxu0 0.0
    %556 = vmatpush1.msra.mxu0 0.0
    %557 = vmatprep.subr.mxu0 0.0
    %558 = vmatpush1.msra.mxu0 0.0
    %559 = vmatprep.subr.mxu0 0.0
    %560 = vmatpush1.msra.mxu0 0.0
    %561 = vmatprep.subr.mxu0 0.0
    %562 = vmatpush1.msra.mxu0 0.0
    %563 = vmatprep.subr.mxu0 0.0
    %564 = vmatpush1.msra.mxu0 0.0
    %565 = vmatprep.subr.mxu0 0.0
    %566 = vmatpush1.msra.mxu0 0.0
    %567 = vmatprep.subr.mxu0 0.0
    %568 = vmatpush1.msra.mxu0 0.0
    %569 = vmatprep.subr.mxu0 0.0
    %570 = vmatpush1.msra.mxu0 0.0
    %571 = vmatprep.subr.mxu0 0.0
    %572 = vmatpush1.msra.mxu0 0.0
    %573 = vmatprep.subr.mxu0 0.0
    %574 = vmatpush1.msra.mxu0 0.0
    %575 = vmatprep.subr.mxu0 0.0
    %576 = vmatpush1.msra.mxu0 0.0
    %577 = vmatprep.subr.mxu0 0.0
    %578 = vmatpush1.msra.mxu0 0.0
    %579 = vmatprep.subr.mxu0 0.0
    %580 = vmatpush1.msra.mxu0 0.0
    %581 = vmatprep.subr.mxu0 0.0
    %582 = vmatpush1.msra.mxu0 0.0
    %583 = vmatprep.subr.mxu0 0.0
    %584 = vmatpush1.msra.mxu0 0.0
    %585 = vmatprep.mubr.f32.mxu0 0.0
    %586 = vmatmul.mubr.f32.gmra.mrb[0].mxu0 %v429
    %v587 = vpop.f32.mrb[0].mxu0
    %v588 = vadd.f32 0.0, %v587
    %v589 = vpop.f32.mrb[0].mxu0
    %v590 = vadd.f32 0.0, %v589
    %591 = vdwg.mxu0
    %592 = vmatprep.subr.mxu0 %v402
    %593 = vmatpush1.msra.mxu0 %v401
    %594 = vmatprep.subr.mxu0 %v408
    %595 = vmatpush1.msra.mxu0 %v407
    %596 = vmatprep.subr.mxu0 %v414
    %597 = vmatpush1.msra.mxu0 %v413
    %598 = vmatprep.subr.mxu0 %v420
    %599 = vmatpush1.msra.mxu0 %v419
    %600 = vmatprep.subr.mxu0 %v448
    %601 = vmatpush1.msra.mxu0 %v445
    %602 = vmatprep.subr.mxu0 0.0
    %603 = vmatpush1.msra.mxu0 0.0
    %604 = vmatprep.subr.mxu0 0.0
    %605 = vmatpush1.msra.mxu0 0.0
    %606 = vmatprep.subr.mxu0 0.0
    %607 = vmatpush1.msra.mxu0 0.0
    %608 = vmatprep.subr.mxu0 0.0
    %609 = vmatpush1.msra.mxu0 0.0
    %610 = vmatprep.subr.mxu0 0.0
    %611 = vmatpush1.msra.mxu0 0.0
    %612 = vmatprep.subr.mxu0 0.0
    %613 = vmatpush1.msra.mxu0 0.0
    %614 = vmatprep.subr.mxu0 0.0
    %615 = vmatpush1.msra.mxu0 0.0
    %616 = vmatprep.subr.mxu0 0.0
    %617 = vmatpush1.msra.mxu0 0.0
    %618 = vmatprep.subr.mxu0 0.0
    %619 = vmatpush1.msra.mxu0 0.0
    %620 = vmatprep.subr.mxu0 0.0
    %621 = vmatpush1.msra.mxu0 0.0
    %622 = vmatprep.subr.mxu0 0.0
    %623 = vmatpush1.msra.mxu0 0.0
    %624 = vmatprep.subr.mxu0 0.0
    %625 = vmatpush1.msra.mxu0 0.0
    %626 = vmatprep.subr.mxu0 0.0
    %627 = vmatpush1.msra.mxu0 0.0
    %628 = vmatprep.subr.mxu0 0.0
    %629 = vmatpush1.msra.mxu0 0.0
    %630 = vmatprep.subr.mxu0 0.0
    %631 = vmatpush1.msra.mxu0 0.0
    %632 = vmatprep.subr.mxu0 0.0
    %633 = vmatpush1.msra.mxu0 0.0
    %634 = vmatprep.subr.mxu0 0.0
    %635 = vmatpush1.msra.mxu0 0.0
    %636 = vmatprep.subr.mxu0 0.0
    %637 = vmatpush1.msra.mxu0 0.0
    %638 = vmatprep.subr.mxu0 0.0
    %639 = vmatpush1.msra.mxu0 0.0
    %640 = vmatprep.subr.mxu0 0.0
    %641 = vmatpush1.msra.mxu0 0.0
    %642 = vmatprep.subr.mxu0 0.0
    %643 = vmatpush1.msra.mxu0 0.0
    %644 = vmatprep.subr.mxu0 0.0
    %645 = vmatpush1.msra.mxu0 0.0
    %646 = vmatprep.subr.mxu0 0.0
    %647 = vmatpush1.msra.mxu0 0.0
    %648 = vmatprep.subr.mxu0 0.0
    %649 = vmatpush1.msra.mxu0 0.0
    %650 = vmatprep.subr.mxu0 0.0
    %651 = vmatpush1.msra.mxu0 0.0
    %652 = vmatprep.subr.mxu0 0.0
    %653 = vmatpush1.msra.mxu0 0.0
    %654 = vmatprep.subr.mxu0 0.0
    %655 = vmatpush1.msra.mxu0 0.0
    %656 = vmatprep.mubr.f32.mxu0 0.0
    %657 = vmatmul.mubr.f32.gmra.mrb[0].mxu0 %v429
    %v658 = vpop.f32.mrb[0].mxu0
    %v659 = vadd.f32 0.0, %v658
    %v660 = vpop.f32.mrb[0].mxu0
    %v661 = vadd.f32 0.0, %v660
    %662 = vdwg.mxu0
    %663 = vst [vmem:[#allocation8] sm:$0xff] %v517
    %664 = vst [vmem:[#allocation8 + $0x8] sm:$0xff] %v519
    %vm665 = vcmask 261120
    %666 = vst.msk [vmem:[#allocation8 + $0x10] sm:$0xff] %vm665, %v588
    %s667 = scalar_lea.vmem [#allocation8], 24
    %668 = vst [vmem:[%s667] sm:$0xff] %v590
    %669 = vst [vmem:[%s667 + $0x8] sm:$0xff] %v659
    %670 = vst.msk [vmem:[%s667 + $0x10] sm:$0xff] %vm665, %v661
    // Predicated region
    $region18: #{tpu_custom_call.1} parent=1 // pred_check
      _
    $region19: #{tpu_custom_call.1} parent=1 // pred_check_branch
      %672 = sbr.rel (0) target = $region21
    $region20: #{tpu_custom_call.1} parent=1 // pred_region
      %s674 = ssub.s32 768, 768
      %675 = vsyncadd [#allocation5], %s674
      %s676 = sshll.u32 [#allocation8], 4
      %s677 = int_to_ptr.vmem [resolvable:$true] %s676
      %682 = dma.vmem_to_hbm [thread:$0]  %s677, 768, %s2, [#allocation5], 384, 384, 24
    $region21: #{tpu_custom_call.1} parent=1 // pred_fallthru
      _
    // Predicated region
    $region22: #{tpu_custom_call.1} parent=1 // pred_check
      _
    $region23: #{tpu_custom_call.1} parent=1 // pred_check_branch
      %684 = sbr.rel (0) target = $region25
    $region24: #{tpu_custom_call.1} parent=1 // pred_region
      %685 = dma.done [#allocation5], 768
    $region25: #{tpu_custom_call.1} parent=1 // pred_fallthru
      _
    %686 = vsyncpa [#allocation4], 1
    %687 = vsyncpa [#allocation7], 1
    %688 = vsyncpa [#allocation5], 1

</llo_original>
